<compile_context>
chip_gen: v6e
topology: v6e:2x2x1
jax: 0.10.0
libtpu: 0.0.40
codegen_flags: <defaults>
</compile_context>

<pallas_src>
import functools

import jax
import jax.numpy as jnp
from jax.experimental import pallas as pl
from jax.experimental.pallas import tpu as pltpu

HIDDEN = 4      # layer1 / layer3 output width
LANE = 128      # TPU lane width
SUB = 16        # sublane granularity for batch tiles (bf16-safe: (16,128) tiling)


def _round_up(x, m):
    return (x + m - 1) // m * m


def critic_kernel(w_ref, sa_ref, q_ref, *, sa_dim, hidden):
    """One batch tile of the critic head (VPU broadcast-FMA formulation).

    w_ref : SMEM flat f32 params [w1 (hidden*sa_dim) | b1 (hidden) | w2 (hidden) | b2 (1)]
    sa_ref: VMEM (sa_dim, bt_sub, 128)  feature-major bf16 input, batch on lanes
    q_ref : VMEM (bt_sub, 128)          lane-dense f32 Q output
    """
    w1_off = 0
    b1_off = hidden * sa_dim
    w2_off = b1_off + hidden
    b2_off = w2_off + hidden

    # Feature-outer / hidden-inner: each feature plane is loaded once per tile
    # (sa_dim loads instead of hidden*sa_dim) and broadcast-FMA'd into `hidden`
    # f32 accumulators. Biases are folded into the first FMA.
    h = [None] * hidden
    for k in range(sa_dim):
        x_k = sa_ref[k].astype(jnp.float32)          # one (bt_sub,128) load per feature
        for j in range(hidden):
            w = w_ref[w1_off + j * sa_dim + k]
            if k == 0:
                h[j] = x_k * w + w_ref[b1_off + j]
            else:
                h[j] = h[j] + x_k * w

    # TODO(synk): nn.Dropout / F.dropout implemented as identity (eval semantics);
    # torch training-mode dropout would stochastically mask/rescale h (q1 != q2).
    q = None
    for j in range(hidden):
        term = jnp.maximum(h[j], 0.0) * w_ref[w2_off + j]
        q = term if q is None else q + term
    q_ref[...] = jnp.maximum(q + w_ref[b2_off], 0.0)


def critic_forward(state, action, params, *, max_batch_sublanes=512,
                   staging_dtype=jnp.bfloat16):
    """state: (B, state_dim), action: (B, action_dim) -> (q1, q2) each (B, 1)."""
    B, state_dim = state.shape
    action_dim = action.shape[1]
    sa_dim = state_dim + action_dim

    # ---- flatten layer1/layer2 params for SMEM scalar access (29 floats) ----
    wpack = jnp.concatenate([
        params["w1"].reshape(-1).astype(jnp.float32),   # (hidden, sa_dim) row-major
        params["b1"].reshape(-1).astype(jnp.float32),
        params["w2"].reshape(-1).astype(jnp.float32),
        params["b2"].reshape(-1).astype(jnp.float32),
    ])

    # ---- batch tiling: batch on the 128-lane axis, bt_sub sublanes per step ----
    rows_needed = pl.cdiv(B, LANE)                      # 128-lane rows of batch
    bt_sub = min(max_batch_sublanes, _round_up(max(rows_needed, 1), SUB))
    if rows_needed >= 2 * SUB:
        # keep at least 2 grid steps: v7x megacore sharding + DMA/compute overlap
        bt_sub = min(bt_sub, _round_up(pl.cdiv(rows_needed, 2), SUB))
    Bm = _round_up(max(rows_needed, 1), bt_sub)
    Bp = Bm * LANE

    # ---- single fused staging pass: feature-major, unpadded feature dim, bf16 ----
    # TODO(synk): ideally this layout transform is fused into the upstream
    # producer of state/action; here it is one small fused XLA op (no f32
    # concatenated intermediate is materialized).
    sa_fm = jnp.zeros((sa_dim, Bp), staging_dtype)
    sa_fm = sa_fm.at[:state_dim, :B].set(state.T.astype(staging_dtype))
    sa_fm = sa_fm.at[state_dim:, :B].set(action.T.astype(staging_dtype))
    sa_fm = sa_fm.reshape(sa_dim, Bm, LANE)

    kernel = functools.partial(critic_kernel, sa_dim=sa_dim, hidden=HIDDEN)

    q_fm = pl.pallas_call(
        kernel,
        out_shape=jax.ShapeDtypeStruct((Bm, LANE), jnp.float32),
        grid=(Bm // bt_sub,),
        in_specs=[
            # tiny weight vector, resident in SMEM for scalar broadcast FMAs
            pl.BlockSpec(memory_space=pltpu.MemorySpace.SMEM),
            # streamed, double-buffered batch tiles (features leading, batch on lanes)
            pl.BlockSpec((sa_dim, bt_sub, LANE), lambda i: (0, i, 0)),
        ],
        out_specs=pl.BlockSpec((bt_sub, LANE), lambda i: (i, 0)),
        compiler_params=pltpu.CompilerParams(
            dimension_semantics=("parallel",)),
    )(wpack, sa_fm)

    q = q_fm.reshape(Bp)[:B].reshape(B, 1)
    # q1 == q2 per the source forward (both towers use layer1/layer2, dropout
    # is identity); duplicate in the wrapper — no redundant HBM store stream.
    return q, q


def init_critic_params(key, state_dim, action_dim):
    """Deterministic PyTorch-style Linear init: U(-1/sqrt(fan_in), 1/sqrt(fan_in))."""
    def linear(key, in_f, out_f):
        kw, kb = jax.random.split(key)
        bound = 1.0 / jnp.sqrt(jnp.float32(in_f))
        w = jax.random.uniform(kw, (out_f, in_f), jnp.float32, -bound, bound)
        b = jax.random.uniform(kb, (out_f,), jnp.float32, -bound, bound)
        return w, b

    k1, k2, k3, k4 = jax.random.split(key, 4)
    sa_dim = state_dim + action_dim
    w1, b1 = linear(k1, sa_dim, HIDDEN)   # layer1
    w2, b2 = linear(k2, HIDDEN, 1)        # layer2
    w3, b3 = linear(k3, sa_dim, HIDDEN)   # layer3 (initialized, unused in forward)
    w4, b4 = linear(k4, HIDDEN, 1)        # layer4 (initialized, unused in forward)
    return {"w1": w1, "b1": b1, "w2": w2, "b2": b2,
            "w3": w3, "b3": b3, "w4": w4, "b4": b4}


def reference_forward(state, action, params):
    """Pure-JAX reference mirroring the PyTorch forward (dropout = identity)."""
    sa = jnp.concatenate([state, action], axis=1)
    h = jnp.maximum(sa @ params["w1"].T + params["b1"], 0.0)
    q = jnp.maximum(h @ params["w2"].T + params["b2"], 0.0)
    return q, q


if __name__ == "__main__":
    B, STATE_DIM, ACTION_DIM = 2, 3, 2

    key = jax.random.PRNGKey(0)
    k_state, k_action, k_params = jax.random.split(key, 3)

    state = jax.random.uniform(k_state, (B, STATE_DIM), jnp.float32)
    action = jax.random.uniform(k_action, (B, ACTION_DIM), jnp.float32)
    params = init_critic_params(k_params, STATE_DIM, ACTION_DIM)

    q1, q2 = critic_forward(state, action, params)
    q1 = jax.block_until_ready(q1)
    q2 = jax.block_until_ready(q2)

    # Tight check vs a reference fed the same bf16-rounded inputs (validates the
    # kernel math), plus a looser check vs the pure-f32 reference (covers the
    # bf16 input-staging rounding).
    r1, r2 = reference_forward(state, action, params)
    state_bf = state.astype(jnp.bfloat16).astype(jnp.float32)
    action_bf = action.astype(jnp.bfloat16).astype(jnp.float32)
    t1, t2 = reference_forward(state_bf, action_bf, params)

    assert q1.shape == (B, 1) and q2.shape == (B, 1)
    assert jnp.allclose(q1, t1, atol=1e-5), (q1, t1)
    assert jnp.allclose(q2, t2, atol=1e-5), (q2, t2)
    assert jnp.allclose(q1, r1, atol=5e-2), (q1, r1)
    assert jnp.allclose(q2, r2, atol=5e-2), (q2, r2)

    print("KERNEL_OK")
</pallas_src>

<mosaic_0001>
module attributes {stable_mosaic.version = 11 : i64} {
  func.func @critic_kernel(%arg0: i32, %arg1: memref<29xf32, #tpu.memory_space<smem>>, %arg2: memref<5x16x128xbf16, #tpu.memory_space<vmem>>, %arg3: memref<16x128xf32, #tpu.memory_space<vmem>>) attributes {dimension_semantics = [#tpu.dimension_semantics<parallel>], iteration_bounds = array<i64: 1>, scalar_prefetch = 0 : i64, scratch_operands = 0 : i64, tpu.core_type = #tpu.core_type<tc>, window_params = [{transform_indices = @transform_0, window_bounds = array<i64: 29>}, {transform_indices = @transform_1, window_bounds = array<i64: 5, 16, 128>}, {transform_indices = @transform_2, window_bounds = array<i64: 16, 128>}]} {
    %c0 = arith.constant 0 : index
    %c0_0 = arith.constant 0 : index
    %c0_1 = arith.constant 0 : index
    %0 = vector.load %arg2[%c0, %c0_0, %c0_1] : memref<5x16x128xbf16, #tpu.memory_space<vmem>>, vector<1x16x128xbf16>
    %1 = vector.shape_cast %0 : vector<1x16x128xbf16> to vector<16x128xbf16>
    %2 = arith.extf %1 : vector<16x128xbf16> to vector<16x128xf32>
    %c0_2 = arith.constant 0 : index
    %3 = memref.load %arg1[%c0_2] : memref<29xf32, #tpu.memory_space<smem>>
    %4 = vector.broadcast %3 : f32 to vector<16x128xf32>
    %5 = arith.mulf %2, %4 : vector<16x128xf32>
    %c20 = arith.constant 20 : index
    %6 = memref.load %arg1[%c20] : memref<29xf32, #tpu.memory_space<smem>>
    %7 = vector.broadcast %6 : f32 to vector<16x128xf32>
    %8 = arith.addf %5, %7 : vector<16x128xf32>
    %c5 = arith.constant 5 : index
    %9 = memref.load %arg1[%c5] : memref<29xf32, #tpu.memory_space<smem>>
    %10 = vector.broadcast %9 : f32 to vector<16x128xf32>
    %11 = arith.mulf %2, %10 : vector<16x128xf32>
    %c21 = arith.constant 21 : index
    %12 = memref.load %arg1[%c21] : memref<29xf32, #tpu.memory_space<smem>>
    %13 = vector.broadcast %12 : f32 to vector<16x128xf32>
    %14 = arith.addf %11, %13 : vector<16x128xf32>
    %c10 = arith.constant 10 : index
    %15 = memref.load %arg1[%c10] : memref<29xf32, #tpu.memory_space<smem>>
    %16 = vector.broadcast %15 : f32 to vector<16x128xf32>
    %17 = arith.mulf %2, %16 : vector<16x128xf32>
    %c22 = arith.constant 22 : index
    %18 = memref.load %arg1[%c22] : memref<29xf32, #tpu.memory_space<smem>>
    %19 = vector.broadcast %18 : f32 to vector<16x128xf32>
    %20 = arith.addf %17, %19 : vector<16x128xf32>
    %c15 = arith.constant 15 : index
    %21 = memref.load %arg1[%c15] : memref<29xf32, #tpu.memory_space<smem>>
    %22 = vector.broadcast %21 : f32 to vector<16x128xf32>
    %23 = arith.mulf %2, %22 : vector<16x128xf32>
    %c23 = arith.constant 23 : index
    %24 = memref.load %arg1[%c23] : memref<29xf32, #tpu.memory_space<smem>>
    %25 = vector.broadcast %24 : f32 to vector<16x128xf32>
    %26 = arith.addf %23, %25 : vector<16x128xf32>
    %c1 = arith.constant 1 : index
    %c0_3 = arith.constant 0 : index
    %c0_4 = arith.constant 0 : index
    %27 = vector.load %arg2[%c1, %c0_3, %c0_4] : memref<5x16x128xbf16, #tpu.memory_space<vmem>>, vector<1x16x128xbf16>
    %28 = vector.shape_cast %27 : vector<1x16x128xbf16> to vector<16x128xbf16>
    %29 = arith.extf %28 : vector<16x128xbf16> to vector<16x128xf32>
    %c1_5 = arith.constant 1 : index
    %30 = memref.load %arg1[%c1_5] : memref<29xf32, #tpu.memory_space<smem>>
    %31 = vector.broadcast %30 : f32 to vector<16x128xf32>
    %32 = arith.mulf %29, %31 : vector<16x128xf32>
    %33 = arith.addf %8, %32 : vector<16x128xf32>
    %c6 = arith.constant 6 : index
    %34 = memref.load %arg1[%c6] : memref<29xf32, #tpu.memory_space<smem>>
    %35 = vector.broadcast %34 : f32 to vector<16x128xf32>
    %36 = arith.mulf %29, %35 : vector<16x128xf32>
    %37 = arith.addf %14, %36 : vector<16x128xf32>
    %c11 = arith.constant 11 : index
    %38 = memref.load %arg1[%c11] : memref<29xf32, #tpu.memory_space<smem>>
    %39 = vector.broadcast %38 : f32 to vector<16x128xf32>
    %40 = arith.mulf %29, %39 : vector<16x128xf32>
    %41 = arith.addf %20, %40 : vector<16x128xf32>
    %c16 = arith.constant 16 : index
    %42 = memref.load %arg1[%c16] : memref<29xf32, #tpu.memory_space<smem>>
    %43 = vector.broadcast %42 : f32 to vector<16x128xf32>
    %44 = arith.mulf %29, %43 : vector<16x128xf32>
    %45 = arith.addf %26, %44 : vector<16x128xf32>
    %c2 = arith.constant 2 : index
    %c0_6 = arith.constant 0 : index
    %c0_7 = arith.constant 0 : index
    %46 = vector.load %arg2[%c2, %c0_6, %c0_7] : memref<5x16x128xbf16, #tpu.memory_space<vmem>>, vector<1x16x128xbf16>
    %47 = vector.shape_cast %46 : vector<1x16x128xbf16> to vector<16x128xbf16>
    %48 = arith.extf %47 : vector<16x128xbf16> to vector<16x128xf32>
    %c2_8 = arith.constant 2 : index
    %49 = memref.load %arg1[%c2_8] : memref<29xf32, #tpu.memory_space<smem>>
    %50 = vector.broadcast %49 : f32 to vector<16x128xf32>
    %51 = arith.mulf %48, %50 : vector<16x128xf32>
    %52 = arith.addf %33, %51 : vector<16x128xf32>
    %c7 = arith.constant 7 : index
    %53 = memref.load %arg1[%c7] : memref<29xf32, #tpu.memory_space<smem>>
    %54 = vector.broadcast %53 : f32 to vector<16x128xf32>
    %55 = arith.mulf %48, %54 : vector<16x128xf32>
    %56 = arith.addf %37, %55 : vector<16x128xf32>
    %c12 = arith.constant 12 : index
    %57 = memref.load %arg1[%c12] : memref<29xf32, #tpu.memory_space<smem>>
    %58 = vector.broadcast %57 : f32 to vector<16x128xf32>
    %59 = arith.mulf %48, %58 : vector<16x128xf32>
    %60 = arith.addf %41, %59 : vector<16x128xf32>
    %c17 = arith.constant 17 : index
    %61 = memref.load %arg1[%c17] : memref<29xf32, #tpu.memory_space<smem>>
    %62 = vector.broadcast %61 : f32 to vector<16x128xf32>
    %63 = arith.mulf %48, %62 : vector<16x128xf32>
    %64 = arith.addf %45, %63 : vector<16x128xf32>
    %c3 = arith.constant 3 : index
    %c0_9 = arith.constant 0 : index
    %c0_10 = arith.constant 0 : index
    %65 = vector.load %arg2[%c3, %c0_9, %c0_10] : memref<5x16x128xbf16, #tpu.memory_space<vmem>>, vector<1x16x128xbf16>
    %66 = vector.shape_cast %65 : vector<1x16x128xbf16> to vector<16x128xbf16>
    %67 = arith.extf %66 : vector<16x128xbf16> to vector<16x128xf32>
    %c3_11 = arith.constant 3 : index
    %68 = memref.load %arg1[%c3_11] : memref<29xf32, #tpu.memory_space<smem>>
    %69 = vector.broadcast %68 : f32 to vector<16x128xf32>
    %70 = arith.mulf %67, %69 : vector<16x128xf32>
    %71 = arith.addf %52, %70 : vector<16x128xf32>
    %c8 = arith.constant 8 : index
    %72 = memref.load %arg1[%c8] : memref<29xf32, #tpu.memory_space<smem>>
    %73 = vector.broadcast %72 : f32 to vector<16x128xf32>
    %74 = arith.mulf %67, %73 : vector<16x128xf32>
    %75 = arith.addf %56, %74 : vector<16x128xf32>
    %c13 = arith.constant 13 : index
    %76 = memref.load %arg1[%c13] : memref<29xf32, #tpu.memory_space<smem>>
    %77 = vector.broadcast %76 : f32 to vector<16x128xf32>
    %78 = arith.mulf %67, %77 : vector<16x128xf32>
    %79 = arith.addf %60, %78 : vector<16x128xf32>
    %c18 = arith.constant 18 : index
    %80 = memref.load %arg1[%c18] : memref<29xf32, #tpu.memory_space<smem>>
    %81 = vector.broadcast %80 : f32 to vector<16x128xf32>
    %82 = arith.mulf %67, %81 : vector<16x128xf32>
    %83 = arith.addf %64, %82 : vector<16x128xf32>
    %c4 = arith.constant 4 : index
    %c0_12 = arith.constant 0 : index
    %c0_13 = arith.constant 0 : index
    %84 = vector.load %arg2[%c4, %c0_12, %c0_13] : memref<5x16x128xbf16, #tpu.memory_space<vmem>>, vector<1x16x128xbf16>
    %85 = vector.shape_cast %84 : vector<1x16x128xbf16> to vector<16x128xbf16>
    %86 = arith.extf %85 : vector<16x128xbf16> to vector<16x128xf32>
    %c4_14 = arith.constant 4 : index
    %87 = memref.load %arg1[%c4_14] : memref<29xf32, #tpu.memory_space<smem>>
    %88 = vector.broadcast %87 : f32 to vector<16x128xf32>
    %89 = arith.mulf %86, %88 : vector<16x128xf32>
    %90 = arith.addf %71, %89 : vector<16x128xf32>
    %c9 = arith.constant 9 : index
    %91 = memref.load %arg1[%c9] : memref<29xf32, #tpu.memory_space<smem>>
    %92 = vector.broadcast %91 : f32 to vector<16x128xf32>
    %93 = arith.mulf %86, %92 : vector<16x128xf32>
    %94 = arith.addf %75, %93 : vector<16x128xf32>
    %c14 = arith.constant 14 : index
    %95 = memref.load %arg1[%c14] : memref<29xf32, #tpu.memory_space<smem>>
    %96 = vector.broadcast %95 : f32 to vector<16x128xf32>
    %97 = arith.mulf %86, %96 : vector<16x128xf32>
    %98 = arith.addf %79, %97 : vector<16x128xf32>
    %c19 = arith.constant 19 : index
    %99 = memref.load %arg1[%c19] : memref<29xf32, #tpu.memory_space<smem>>
    %100 = vector.broadcast %99 : f32 to vector<16x128xf32>
    %101 = arith.mulf %86, %100 : vector<16x128xf32>
    %102 = arith.addf %83, %101 : vector<16x128xf32>
    %cst = arith.constant 0.000000e+00 : f32
    %103 = vector.broadcast %cst : f32 to vector<16x128xf32>
    %104 = arith.maximumf %90, %103 : vector<16x128xf32>
    %c24 = arith.constant 24 : index
    %105 = memref.load %arg1[%c24] : memref<29xf32, #tpu.memory_space<smem>>
    %106 = vector.broadcast %105 : f32 to vector<16x128xf32>
    %107 = arith.mulf %104, %106 : vector<16x128xf32>
    %cst_15 = arith.constant 0.000000e+00 : f32
    %108 = vector.broadcast %cst_15 : f32 to vector<16x128xf32>
    %109 = arith.maximumf %94, %108 : vector<16x128xf32>
    %c25 = arith.constant 25 : index
    %110 = memref.load %arg1[%c25] : memref<29xf32, #tpu.memory_space<smem>>
    %111 = vector.broadcast %110 : f32 to vector<16x128xf32>
    %112 = arith.mulf %109, %111 : vector<16x128xf32>
    %113 = arith.addf %107, %112 : vector<16x128xf32>
    %cst_16 = arith.constant 0.000000e+00 : f32
    %114 = vector.broadcast %cst_16 : f32 to vector<16x128xf32>
    %115 = arith.maximumf %98, %114 : vector<16x128xf32>
    %c26 = arith.constant 26 : index
    %116 = memref.load %arg1[%c26] : memref<29xf32, #tpu.memory_space<smem>>
    %117 = vector.broadcast %116 : f32 to vector<16x128xf32>
    %118 = arith.mulf %115, %117 : vector<16x128xf32>
    %119 = arith.addf %113, %118 : vector<16x128xf32>
    %cst_17 = arith.constant 0.000000e+00 : f32
    %120 = vector.broadcast %cst_17 : f32 to vector<16x128xf32>
    %121 = arith.maximumf %102, %120 : vector<16x128xf32>
    %c27 = arith.constant 27 : index
    %122 = memref.load %arg1[%c27] : memref<29xf32, #tpu.memory_space<smem>>
    %123 = vector.broadcast %122 : f32 to vector<16x128xf32>
    %124 = arith.mulf %121, %123 : vector<16x128xf32>
    %125 = arith.addf %119, %124 : vector<16x128xf32>
    %c28 = arith.constant 28 : index
    %126 = memref.load %arg1[%c28] : memref<29xf32, #tpu.memory_space<smem>>
    %127 = vector.broadcast %126 : f32 to vector<16x128xf32>
    %128 = arith.addf %125, %127 : vector<16x128xf32>
    %cst_18 = arith.constant 0.000000e+00 : f32
    %129 = vector.broadcast %cst_18 : f32 to vector<16x128xf32>
    %130 = arith.maximumf %128, %129 : vector<16x128xf32>
    %c0_19 = arith.constant 0 : index
    %c0_20 = arith.constant 0 : index
    %131 = vector.load %arg3[%c0_19, %c0_20] : memref<16x128xf32, #tpu.memory_space<vmem>>, vector<16x128xf32>
    tpu.vector_store %arg3[%c0_19, %c0_20], %130 {strides = array<i32>} : memref<16x128xf32, #tpu.memory_space<vmem>>, vector<16x128xf32>,
    return
  }
  func.func @transform_0(%arg0: i32) -> i32 {
    %c0_i32 = arith.constant 0 : i32
    %c0_i32_0 = arith.constant 0 : i32
    return %c0_i32 : i32
  }
  func.func @transform_1(%arg0: i32) -> (i32, i32, i32) {
    %c0_i32 = arith.constant 0 : i32
    %c0_i32_0 = arith.constant 0 : i32
    %c0_i32_1 = arith.constant 0 : i32
    return %c0_i32, %arg0, %c0_i32_0 : i32, i32, i32
  }
  func.func @transform_2(%arg0: i32) -> (i32, i32) {
    %c0_i32 = arith.constant 0 : i32
    %c0_i32_0 = arith.constant 0 : i32
    return %arg0, %c0_i32 : i32, i32
  }
}

</mosaic_0001>

<llo_original>
// kernel: tpu_custom_call.1
$region0: #{tpu_custom_call.1}
  #allocation0 [shape = 'u32[]', space=smem, size = 0x4, offset = 0x4, fixed_abs, tag = 'smem constant byte address 0x4 - core index']
  #allocation1 [shape = 'u32[144,128]{1,0:T(1,128)}', space=vmem, size = 0x12000, scoped, tag = 'internal scratch']
  %s0 = inlined_call_operand.hbm [shape: f32[29], index: 0, kind: input, shape index: {}]
  %s1 = inlined_call_operand.hbm [shape: bf16[5,16,128], index: 1, kind: input, shape index: {}]
  %s2 = inlined_call_operand.hbm [shape: f32[16,128], index: 2, kind: output, shape index: {}]
  %s3 = sld [smem:[#allocation0]]
  $region26: #{tpu_custom_call.1} parent=0
    _
  %s5 = ssub.s32 1, %s3
  %s6 = scalar_select 0, %s5, %s3
  $region1: #{tpu_custom_call.1} parent=0
    #allocation2 [shape = 'u8[512]{0}', space=smem, size = 0x200, scoped, tag = 'input window, operand 0, single buffered']
    #allocation3 [shape = 's32[1]{0}', space=sflag, size = 0x4, scoped, tag = 'scoped memory for tpu_custom_call.1']
    #allocation4 [shape = 's32[1]{0}', space=sflag, size = 0x4, scoped, tag = 'scoped memory for tpu_custom_call.1']
    #allocation5 [shape = 's32[1]{0}', space=sflag, size = 0x4, scoped, tag = 'scoped memory for tpu_custom_call.1']
    #allocation6 [shape = 'u8[20480]{0}', space=vmem, size = 0x5000, scoped, tag = 'input window, operand 1, single buffered']
    #allocation7 [shape = 'u8[8192]{0}', space=vmem, size = 0x2000, scoped, tag = 'output window, operand 0, single buffered']
    %7 = vsyncpa [#allocation5], 0
    %8 = vsyncpa [#allocation3], 0
    %9 = vsyncpa [#allocation4], 0
    // Predicated region
    $region2: #{tpu_custom_call.1} parent=1 // pred_check
      _
    $region3: #{tpu_custom_call.1} parent=1 // pred_check_branch
      %11 = sbr.rel (0) target = $region5
    $region4: #{tpu_custom_call.1} parent=1 // pred_region
      %s13 = ssub.s32 16, 16
      %14 = vsyncadd [#allocation5], %s13
      %17 = dma.hbm_to_smem %s0, 16, [#allocation2], [#allocation5]
    $region5: #{tpu_custom_call.1} parent=1 // pred_fallthru
      _
    // Predicated region
    $region6: #{tpu_custom_call.1} parent=1 // pred_check
      _
    $region7: #{tpu_custom_call.1} parent=1 // pred_check_branch
      %19 = sbr.rel (0) target = $region9
    $region8: #{tpu_custom_call.1} parent=1 // pred_region
      %s21 = ssub.s32 640, 640
      %22 = vsyncadd [#allocation3], %s21
      %s23 = sshll.u32 [#allocation6], 4
      %s24 = int_to_ptr.vmem [resolvable:$true] %s23
      %29 = dma.hbm_to_vmem [thread:$0]  %s1, 640, %s24, [#allocation3], 64, 64, 4
    $region9: #{tpu_custom_call.1} parent=1 // pred_fallthru
      _
    // Predicated region
    $region10: #{tpu_custom_call.1} parent=1 // pred_check
      _
    $region11: #{tpu_custom_call.1} parent=1 // pred_check_branch
      %31 = sbr.rel (0) target = $region13
    $region12: #{tpu_custom_call.1} parent=1 // pred_region
      %32 = dma.done [#allocation5], 16
    $region13: #{tpu_custom_call.1} parent=1 // pred_fallthru
      _
    // Predicated region
    $region14: #{tpu_custom_call.1} parent=1 // pred_check
      _
    $region15: #{tpu_custom_call.1} parent=1 // pred_check_branch
      %34 = sbr.rel (0) target = $region17
    $region16: #{tpu_custom_call.1} parent=1 // pred_region
      %35 = dma.done [#allocation3], 640
    $region17: #{tpu_custom_call.1} parent=1 // pred_fallthru
      _
    %36 = sfence
    %v37 = vld [vmem:[#allocation6] sm:$0xf]
    %v38 = vld [vmem:[#allocation6 + $0x4] sm:$0xf]
    %v39 = vunpack.c.l.bf16 %v37
    %v40 = vunpack.c.l.bf16 %v38
    %s41 = sld [smem:[#allocation2]]
    %v42 = vstv %s41
    %v43 = vmul.f32 %v39, %v42
    %v44 = vmul.f32 %v40, %v42
    %s45 = sld [smem:[#allocation2 + $0x14]]
    %v46 = vstv %s45
    %v47 = vadd.f32 %v43, %v46
    %v48 = vadd.f32 %v44, %v46
    %s49 = sld [smem:[#allocation2 + $0x5]]
    %v50 = vstv %s49
    %v51 = vmul.f32 %v39, %v50
    %v52 = vmul.f32 %v40, %v50
    %s53 = sld [smem:[#allocation2 + $0x15]]
    %v54 = vstv %s53
    %v55 = vadd.f32 %v51, %v54
    %v56 = vadd.f32 %v52, %v54
    %s57 = sld [smem:[#allocation2 + $0xa]]
    %v58 = vstv %s57
    %v59 = vmul.f32 %v39, %v58
    %v60 = vmul.f32 %v40, %v58
    %s61 = sld [smem:[#allocation2 + $0x16]]
    %v62 = vstv %s61
    %v63 = vadd.f32 %v59, %v62
    %v64 = vadd.f32 %v60, %v62
    %s65 = sld [smem:[#allocation2 + $0xf]]
    %v66 = vstv %s65
    %v67 = vmul.f32 %v39, %v66
    %v68 = vmul.f32 %v40, %v66
    %s69 = sld [smem:[#allocation2 + $0x17]]
    %v70 = vstv %s69
    %v71 = vadd.f32 %v67, %v70
    %v72 = vadd.f32 %v68, %v70
    %s73 = scalar_lea.vmem [#allocation6], 8
    %v74 = vld [vmem:[%s73] sm:$0xf]
    %v75 = vld [vmem:[%s73 + $0x4] sm:$0xf]
    %v76 = vunpack.c.l.bf16 %v74
    %v77 = vunpack.c.l.bf16 %v75
    %s78 = sld [smem:[#allocation2 + $0x1]]
    %v79 = vstv %s78
    %v80 = vmul.f32 %v76, %v79
    %v81 = vmul.f32 %v77, %v79
    %v82 = vadd.f32 %v47, %v80
    %v83 = vadd.f32 %v48, %v81
    %s84 = sld [smem:[#allocation2 + $0x6]]
    %v85 = vstv %s84
    %v86 = vmul.f32 %v76, %v85
    %v87 = vmul.f32 %v77, %v85
    %v88 = vadd.f32 %v55, %v86
    %v89 = vadd.f32 %v56, %v87
    %s90 = sld [smem:[#allocation2 + $0xb]]
    %v91 = vstv %s90
    %v92 = vmul.f32 %v76, %v91
    %v93 = vmul.f32 %v77, %v91
    %v94 = vadd.f32 %v63, %v92
    %v95 = vadd.f32 %v64, %v93
    %s96 = sld [smem:[#allocation2 + $0x10]]
    %v97 = vstv %s96
    %v98 = vmul.f32 %v76, %v97
    %v99 = vmul.f32 %v77, %v97
    %v100 = vadd.f32 %v71, %v98
    %v101 = vadd.f32 %v72, %v99
    %s102 = scalar_lea.vmem [#allocation6], 16
    %v103 = vld [vmem:[%s102] sm:$0xf]
    %v104 = vld [vmem:[%s102 + $0x4] sm:$0xf]
    %v105 = vunpack.c.l.bf16 %v103
    %v106 = vunpack.c.l.bf16 %v104
    %s107 = sld [smem:[#allocation2 + $0x2]]
    %v108 = vstv %s107
    %v109 = vmul.f32 %v105, %v108
    %v110 = vmul.f32 %v106, %v108
    %v111 = vadd.f32 %v82, %v109
    %v112 = vadd.f32 %v83, %v110
    %s113 = sld [smem:[#allocation2 + $0x7]]
    %v114 = vstv %s113
    %v115 = vmul.f32 %v105, %v114
    %v116 = vmul.f32 %v106, %v114
    %v117 = vadd.f32 %v88, %v115
    %v118 = vadd.f32 %v89, %v116
    %s119 = sld [smem:[#allocation2 + $0xc]]
    %v120 = vstv %s119
    %v121 = vmul.f32 %v105, %v120
    %v122 = vmul.f32 %v106, %v120
    %v123 = vadd.f32 %v94, %v121
    %v124 = vadd.f32 %v95, %v122
    %s125 = sld [smem:[#allocation2 + $0x11]]
    %v126 = vstv %s125
    %v127 = vmul.f32 %v105, %v126
    %v128 = vmul.f32 %v106, %v126
    %v129 = vadd.f32 %v100, %v127
    %v130 = vadd.f32 %v101, %v128
    %s131 = scalar_lea.vmem [#allocation6], 24
    %v132 = vld [vmem:[%s131] sm:$0xf]
    %v133 = vld [vmem:[%s131 + $0x4] sm:$0xf]
    %v134 = vunpack.c.l.bf16 %v132
    %v135 = vunpack.c.l.bf16 %v133
    %s136 = sld [smem:[#allocation2 + $0x3]]
    %v137 = vstv %s136
    %v138 = vmul.f32 %v134, %v137
    %v139 = vmul.f32 %v135, %v137
    %v140 = vadd.f32 %v111, %v138
    %v141 = vadd.f32 %v112, %v139
    %s142 = sld [smem:[#allocation2 + $0x8]]
    %v143 = vstv %s142
    %v144 = vmul.f32 %v134, %v143
    %v145 = vmul.f32 %v135, %v143
    %v146 = vadd.f32 %v117, %v144
    %v147 = vadd.f32 %v118, %v145
    %s148 = sld [smem:[#allocation2 + $0xd]]
    %v149 = vstv %s148
    %v150 = vmul.f32 %v134, %v149
    %v151 = vmul.f32 %v135, %v149
    %v152 = vadd.f32 %v123, %v150
    %v153 = vadd.f32 %v124, %v151
    %s154 = sld [smem:[#allocation2 + $0x12]]
    %v155 = vstv %s154
    %v156 = vmul.f32 %v134, %v155
    %v157 = vmul.f32 %v135, %v155
    %v158 = vadd.f32 %v129, %v156
    %v159 = vadd.f32 %v130, %v157
    %s160 = scalar_lea.vmem [#allocation6], 32
    %v161 = vld [vmem:[%s160] sm:$0xf]
    %v162 = vld [vmem:[%s160 + $0x4] sm:$0xf]
    %v163 = vunpack.c.l.bf16 %v161
    %v164 = vunpack.c.l.bf16 %v162
    %s165 = sld [smem:[#allocation2 + $0x4]]
    %v166 = vstv %s165
    %v167 = vmul.f32 %v163, %v166
    %v168 = vmul.f32 %v164, %v166
    %v169 = vadd.f32 %v140, %v167
    %v170 = vadd.f32 %v141, %v168
    %s171 = sld [smem:[#allocation2 + $0x9]]
    %v172 = vstv %s171
    %v173 = vmul.f32 %v163, %v172
    %v174 = vmul.f32 %v164, %v172
    %v175 = vadd.f32 %v146, %v173
    %v176 = vadd.f32 %v147, %v174
    %s177 = sld [smem:[#allocation2 + $0xe]]
    %v178 = vstv %s177
    %v179 = vmul.f32 %v163, %v178
    %v180 = vmul.f32 %v164, %v178
    %v181 = vadd.f32 %v152, %v179
    %v182 = vadd.f32 %v153, %v180
    %s183 = sld [smem:[#allocation2 + $0x13]]
    %v184 = vstv %s183
    %v185 = vmul.f32 %v163, %v184
    %v186 = vmul.f32 %v164, %v184
    %v187 = vadd.f32 %v158, %v185
    %v188 = vadd.f32 %v159, %v186
    %v189 = vmax.f32 %v169, 0.0
    %v190 = vmax.f32 %v170, 0.0
    %s191 = sld [smem:[#allocation2 + $0x18]]
    %v192 = vstv %s191
    %v193 = vmul.f32 %v189, %v192
    %v194 = vmul.f32 %v190, %v192
    %v195 = vmax.f32 %v175, 0.0
    %v196 = vmax.f32 %v176, 0.0
    %s197 = sld [smem:[#allocation2 + $0x19]]
    %v198 = vstv %s197
    %v199 = vmul.f32 %v195, %v198
    %v200 = vmul.f32 %v196, %v198
    %v201 = vadd.f32 %v193, %v199
    %v202 = vadd.f32 %v194, %v200
    %v203 = vmax.f32 %v181, 0.0
    %v204 = vmax.f32 %v182, 0.0
    %s205 = sld [smem:[#allocation2 + $0x1a]]
    %v206 = vstv %s205
    %v207 = vmul.f32 %v203, %v206
    %v208 = vmul.f32 %v204, %v206
    %v209 = vadd.f32 %v201, %v207
    %v210 = vadd.f32 %v202, %v208
    %v211 = vmax.f32 %v187, 0.0
    %v212 = vmax.f32 %v188, 0.0
    %s213 = sld [smem:[#allocation2 + $0x1b]]
    %v214 = vstv %s213
    %v215 = vmul.f32 %v211, %v214
    %v216 = vmul.f32 %v212, %v214
    %v217 = vadd.f32 %v209, %v215
    %v218 = vadd.f32 %v210, %v216
    %s219 = sld [smem:[#allocation2 + $0x1c]]
    %v220 = vstv %s219
    %v221 = vadd.f32 %v217, %v220
    %v222 = vadd.f32 %v218, %v220
    %v223 = vmax.f32 %v221, 0.0
    %v224 = vmax.f32 %v222, 0.0
    %225 = vst [vmem:[#allocation7] sm:$0xff] %v223
    %226 = vst [vmem:[#allocation7 + $0x8] sm:$0xff] %v224
    // Predicated region
    $region18: #{tpu_custom_call.1} parent=1 // pred_check
      _
    $region19: #{tpu_custom_call.1} parent=1 // pred_check_branch
      %228 = sbr.rel (0) target = $region21
    $region20: #{tpu_custom_call.1} parent=1 // pred_region
      %s230 = ssub.s32 256, 256
      %231 = vsyncadd [#allocation4], %s230
      %s232 = sshll.u32 [#allocation7], 4
      %s233 = int_to_ptr.vmem [resolvable:$true] %s232
      %238 = dma.vmem_to_hbm [thread:$0]  %s233, 256, %s2, [#allocation4], 128, 128, 8
    $region21: #{tpu_custom_call.1} parent=1 // pred_fallthru
      _
    // Predicated region
    $region22: #{tpu_custom_call.1} parent=1 // pred_check
      _
    $region23: #{tpu_custom_call.1} parent=1 // pred_check_branch
      %240 = sbr.rel (0) target = $region25
    $region24: #{tpu_custom_call.1} parent=1 // pred_region
      %241 = dma.done [#allocation4], 256
    $region25: #{tpu_custom_call.1} parent=1 // pred_fallthru
      _
    %242 = vsyncpa [#allocation3], 1
    %243 = vsyncpa [#allocation4], 1
    %244 = vsyncpa [#allocation5], 1

</llo_original>
